<compile_context>
chip_gen: v6e
topology: v6e:2x2x1
jax: 0.10.0
libtpu: 0.0.40
codegen_flags: <defaults>
</compile_context>

<pallas_src>
import functools

import jax
import jax.numpy as jnp
from jax.experimental import pallas as pl
from jax.experimental.pallas import tpu as pltpu

EPS = 1e-5


# ---------------------------------------------------------------------------
# In-kernel helpers (traced inside the Pallas kernels)
# ---------------------------------------------------------------------------
def _conv3x3_banded(x_flat, m_ref, H, mxu_dtype):
    """3x3 'same' conv of B stacked images in flat lane-dense layout.

    x_flat: (rows, W*Cin) f32 value, rows = B*H (whole images, row-major).
    m_ref : (3, W*Cin, W*Cout) VMEM ref of banded per-ky weight matrices
            (width + channel mixing folded into the matmul K/N dims).
    returns (rows, W*Cout) f32.

    The conv is three lane-dense MXU matmuls plus two sublane row shifts —
    no padded scratch, no im2col patch buffer, no masked sub-128-lane stores.
    """
    rows, wci = x_flat.shape
    zrow = jnp.zeros((1, wci), x_flat.dtype)
    x_dn = jnp.concatenate([zrow, x_flat[:rows - 1, :]], axis=0)  # row h -> x[h-1]
    x_up = jnp.concatenate([x_flat[1:, :], zrow], axis=0)         # row h -> x[h+1]
    if rows != H:
        # Several images stacked in this block: zero rows that leaked across
        # image boundaries (first / last row of every image).
        rid = jax.lax.broadcasted_iota(jnp.int32, x_flat.shape, 0) % H
        x_dn = jnp.where(rid == 0, 0.0, x_dn)
        x_up = jnp.where(rid == H - 1, 0.0, x_up)

    def mm(a, k):
        if mxu_dtype is not None:
            a = a.astype(mxu_dtype)
        return jnp.dot(a, m_ref[k], preferred_element_type=jnp.float32)

    return mm(x_dn, 0) + mm(x_flat, 1) + mm(x_up, 2)


def _partial_stats(z):
    """Per-(w, c)-lane partial (sum, sumsq) of z:(rows, W*C) -> (1, 2, W*C).

    One lane-dense store per step; the W-fold / cross-step reduction and the
    channel fold happen wrapper-side on tiny arrays.
    """
    s1 = jnp.sum(z, axis=0, keepdims=True)
    s2 = jnp.sum(z * z, axis=0, keepdims=True)
    return jnp.concatenate([s1, s2], axis=0)[None]   # (1, 2, W*C)


# ---------------------------------------------------------------------------
# Stage 1: conv1 (+ optional 1x1 projection shortcut) and BN partial stats
# ---------------------------------------------------------------------------
def _stage1_proj_kernel(x_ref, m1_ref, ms_ref,
                        z1_ref, zs_ref, st1_ref, sts_ref, *, H, mxu_dtype):
    x = x_ref[...].astype(jnp.float32)
    z1 = _conv3x3_banded(x, m1_ref, H, mxu_dtype)
    z1_ref[...] = z1.astype(z1_ref.dtype)
    st1_ref[...] = _partial_stats(z1)
    # Projection shortcut: 1x1 conv in flat layout (bias dropped — BN cancels).
    xs = x.astype(mxu_dtype) if mxu_dtype is not None else x
    zs = jnp.dot(xs, ms_ref[...], preferred_element_type=jnp.float32)
    zs_ref[...] = zs.astype(zs_ref.dtype)
    sts_ref[...] = _partial_stats(zs)


def _stage1_id_kernel(x_ref, m1_ref, z1_ref, st1_ref, *, H, mxu_dtype):
    z1 = _conv3x3_banded(x_ref[...].astype(jnp.float32), m1_ref, H, mxu_dtype)
    z1_ref[...] = z1.astype(z1_ref.dtype)
    st1_ref[...] = _partial_stats(z1)


# ---------------------------------------------------------------------------
# Stage 2: fused bn1 (folded scale/shift) + relu, conv2, BN2 partial stats
# ---------------------------------------------------------------------------
def _stage2_kernel(z1_ref, sc1_ref, sh1_ref, m2_ref,
                   z2_ref, st2_ref, *, H, mxu_dtype):
    # scale/shift arrive pre-broadcast to the lane-dense (1, W*C) layout.
    y1 = jnp.maximum(z1_ref[...].astype(jnp.float32) * sc1_ref[...]
                     + sh1_ref[...], 0.0)
    z2 = _conv3x3_banded(y1, m2_ref, H, mxu_dtype)
    z2_ref[...] = z2.astype(z2_ref.dtype)
    st2_ref[...] = _partial_stats(z2)


# ---------------------------------------------------------------------------
# Stage 3: fused bn2 + relu + residual add (lane-dense big row blocks)
# ---------------------------------------------------------------------------
def _stage3_proj_kernel(z2_ref, zs_ref, sc2_ref, sh2_ref, scs_ref, shs_ref,
                        out_ref):
    main = jnp.maximum(z2_ref[...].astype(jnp.float32) * sc2_ref[...]
                       + sh2_ref[...], 0.0)
    short = zs_ref[...].astype(jnp.float32) * scs_ref[...] + shs_ref[...]
    out_ref[...] = (main + short).astype(out_ref.dtype)


def _stage3_id_kernel(z2_ref, x_ref, sc2_ref, sh2_ref, out_ref):
    main = jnp.maximum(z2_ref[...].astype(jnp.float32) * sc2_ref[...]
                       + sh2_ref[...], 0.0)
    out_ref[...] = (main + x_ref[...].astype(jnp.float32)).astype(out_ref.dtype)


# ---------------------------------------------------------------------------
# Wrapper-side helpers
# ---------------------------------------------------------------------------
def _band_matrices(w3, W, dtype):
    """Fold a (3,3,Cin,Cout) conv kernel into 3 banded (W*Cin, W*Cout) matrices
    so a padding=1 3x3 conv becomes 3 lane-dense matmuls on (rows, W*Cin) slabs:
      M_ky[wi*Cin+ci, wo*Cout+co] = w3[ky, wi-wo+1, ci, co]  (when in {0,1,2}).
    """
    mats = []
    for ky in range(3):
        m = sum(jnp.kron(jnp.eye(W, k=1 - kx, dtype=w3.dtype), w3[ky, kx])
                for kx in range(3))
        mats.append(m)
    return jnp.stack(mats).astype(dtype)


def _bn_fold(stats, count, gamma, beta, W, C):
    """Reduce per-step (sum, sumsq) lane partials and fold training-mode BN
    into per-channel scale/shift, pre-broadcast to the lane-dense (1, W*C)
    layout the kernels consume (z*scale + shift == bn(z))."""
    s = jnp.sum(stats, axis=0).reshape(2, W, C).sum(axis=1)     # (2, C)
    mean = s[0] / count
    var = jnp.maximum(s[1] / count - mean * mean, 0.0)  # biased var, guard cancel
    scale = gamma * jax.lax.rsqrt(var + EPS)
    shift = beta - mean * scale
    return (jnp.tile(scale, W).reshape(1, W * C),
            jnp.tile(shift, W).reshape(1, W * C))


def _pick_batch_block(n, per_image_bytes, budget=4 << 20, min_steps=4):
    """Images per grid step for stages 1-2: as large as the VMEM budget allows
    while keeping >= min_steps pipeline steps when the batch permits."""
    best = 1
    for b in range(1, n + 1):
        if n % b:
            continue
        if b * per_image_bytes > budget:
            break
        if b == 1 or n // b >= min_steps:
            best = b
    return best


def _pick_row_block(rows, max_rows=1024):
    """Stage-3 rows per step: largest multiple-of-8 divisor <= max_rows that
    still leaves >= 2 pipeline steps (falls back to the full extent)."""
    best = None
    for r in range(8, min(rows, max_rows) + 1, 8):
        if rows % r == 0:
            if rows // r >= 2:
                best = r
            elif best is None:
                best = r
    # TODO(synk): rows not a multiple of 8 falls back to one full-extent block;
    # fine at small sizes, would need padding for very large inputs.
    return best if best is not None else rows


def _cparams(step_bytes):
    limit = int(min(100 << 20, max(16 << 20, 4 * step_bytes)))
    return pltpu.CompilerParams(dimension_semantics=("parallel",),
                                vmem_limit_bytes=limit)


# ---------------------------------------------------------------------------
# Forward
# ---------------------------------------------------------------------------
def residual_plain_block_nhwc(x, params, *, act_dtype=jnp.bfloat16,
                              mxu_dtype=None):
    """NHWC-native forward of ResidualPlainBlock (training-mode BN).

    act_dtype : HBM storage dtype of inter-stage activations (bf16 halves the
                stage-boundary DMA traffic; f32 for bit-tight checks).
    mxu_dtype : optional matmul-operand cast.  None keeps f32 (at small channel
                counts the cast is pure VPU overhead, the MXU is not the
                bottleneck); use bf16 for production channel widths.
    """
    x = x.astype(jnp.float32)
    N, H, W, Cin = x.shape
    Cout = params["w1"].shape[-1]
    projection = "ws" in params
    assert projection == (Cin != Cout), "projection shortcut iff in_ch != out_ch"

    WCi, WCo = W * Cin, W * Cout
    rows = N * H
    count = float(N * H * W)
    mat_dtype = jnp.float32 if mxu_dtype is None else mxu_dtype
    act_b = jnp.dtype(act_dtype).itemsize
    mat_b = jnp.dtype(mat_dtype).itemsize

    # Banded conv weights (built once) and flat lane-dense activations.
    m1 = _band_matrices(params["w1"], W, mat_dtype)            # (3, WCi, WCo)
    m2 = _band_matrices(params["w2"], W, mat_dtype)            # (3, WCo, WCo)
    x_flat = x.reshape(rows, WCi)                              # free reshape

    # Stage 1/2 blocking: whole images per step, VMEM-budgeted.
    per_img = H * (WCi * 4 + 2 * WCo * max(4, act_b))
    bimg = _pick_batch_block(N, per_img)
    if (bimg * H) % 8 != 0:
        bimg = N                       # full-extent block is always legal
    n_steps = N // bimg
    row_blk = bimg * H

    act_spec_i = pl.BlockSpec((row_blk, WCi), lambda i: (i, 0))
    act_spec_o = pl.BlockSpec((row_blk, WCo), lambda i: (i, 0))
    st_spec = pl.BlockSpec((1, 2, WCo), lambda i: (i, 0, 0))
    vec_spec = pl.BlockSpec((1, WCo), lambda i: (0, 0))
    m1_spec = pl.BlockSpec((3, WCi, WCo), lambda i: (0, 0, 0))
    m2_spec = pl.BlockSpec((3, WCo, WCo), lambda i: (0, 0, 0))
    ms_spec = pl.BlockSpec((WCi, WCo), lambda i: (0, 0))

    act_shape = jax.ShapeDtypeStruct((rows, WCo), act_dtype)
    st_shape = jax.ShapeDtypeStruct((n_steps, 2, WCo), jnp.float32)

    conv1_flops = 2 * rows * WCi * WCo * 3
    conv2_flops = 2 * rows * WCo * WCo * 3

    # ---- stage 1: conv1 (+ 1x1 projection shortcut) + BN partial stats -----
    if projection:
        ms = jnp.kron(jnp.eye(W, dtype=params["ws"].dtype),
                      params["ws"]).astype(mat_dtype)          # (WCi, WCo)
        step_bytes = (2 * row_blk * (WCi * 4 + 2 * WCo * act_b)
                      + 4 * WCi * WCo * mat_b)
        z1, zs, st1, sts = pl.pallas_call(
            functools.partial(_stage1_proj_kernel, H=H, mxu_dtype=mxu_dtype),
            grid=(n_steps,),
            in_specs=[act_spec_i, m1_spec, ms_spec],
            out_specs=[act_spec_o, act_spec_o, st_spec, st_spec],
            out_shape=[act_shape, act_shape, st_shape, st_shape],
            compiler_params=_cparams(step_bytes),
            cost_estimate=pl.CostEstimate(
                flops=conv1_flops + 2 * rows * WCi * WCo, transcendentals=0,
                bytes_accessed=rows * (WCi * 4 + 2 * WCo * act_b)
                               + 4 * WCi * WCo * mat_b),
        )(x_flat, m1, ms)
    else:
        zs, sts = None, None
        step_bytes = (2 * row_blk * (WCi * 4 + WCo * act_b)
                      + 3 * WCi * WCo * mat_b)
        z1, st1 = pl.pallas_call(
            functools.partial(_stage1_id_kernel, H=H, mxu_dtype=mxu_dtype),
            grid=(n_steps,),
            in_specs=[act_spec_i, m1_spec],
            out_specs=[act_spec_o, st_spec],
            out_shape=[act_shape, st_shape],
            compiler_params=_cparams(step_bytes),
            cost_estimate=pl.CostEstimate(
                flops=conv1_flops, transcendentals=0,
                bytes_accessed=rows * (WCi * 4 + WCo * act_b)
                               + 3 * WCi * WCo * mat_b),
        )(x_flat, m1)

    # BN1 folded to lane-dense (1, W*Cout) scale/shift (tiny wrapper ops).
    sc1, sh1 = _bn_fold(st1, count, params["g1"], params["be1"], W, Cout)

    # ---- stage 2: fused bn1 + relu, conv2, BN2 partial stats ----------------
    step_bytes2 = 2 * row_blk * 2 * WCo * act_b + 3 * WCo * WCo * mat_b
    z2, st2 = pl.pallas_call(
        functools.partial(_stage2_kernel, H=H, mxu_dtype=mxu_dtype),
        grid=(n_steps,),
        in_specs=[act_spec_o, vec_spec, vec_spec, m2_spec],
        out_specs=[act_spec_o, st_spec],
        out_shape=[act_shape, st_shape],
        compiler_params=_cparams(step_bytes2),
        cost_estimate=pl.CostEstimate(
            flops=conv2_flops + 4 * rows * WCo, transcendentals=0,
            bytes_accessed=rows * 2 * WCo * act_b + 3 * WCo * WCo * mat_b),
    )(z1, sc1, sh1, m2)

    sc2, sh2 = _bn_fold(st2, count, params["g2"], params["be2"], W, Cout)

    # ---- stage 3: fused bn2 + relu + residual add (big lane-dense rows) -----
    rps = _pick_row_block(rows)
    grid3 = (rows // rps,)
    row_spec = pl.BlockSpec((rps, WCo), lambda i: (i, 0))
    out_shape3 = jax.ShapeDtypeStruct((rows, WCo), jnp.float32)
    step_bytes3 = 2 * rps * WCo * (2 * act_b + 4)

    if projection:
        scs, shs = _bn_fold(sts, count, params["gs"], params["bes"], W, Cout)
        out_flat = pl.pallas_call(
            _stage3_proj_kernel,
            grid=grid3,
            in_specs=[row_spec, row_spec, vec_spec, vec_spec, vec_spec, vec_spec],
            out_specs=row_spec,
            out_shape=out_shape3,
            compiler_params=_cparams(step_bytes3),
            cost_estimate=pl.CostEstimate(
                flops=8 * rows * WCo, transcendentals=0,
                bytes_accessed=rows * WCo * (2 * act_b + 4)),
        )(z2, zs, sc2, sh2, scs, shs)
    else:
        out_flat = pl.pallas_call(
            _stage3_id_kernel,
            grid=grid3,
            in_specs=[row_spec, row_spec, vec_spec, vec_spec],
            out_specs=row_spec,
            out_shape=out_shape3,
            compiler_params=_cparams(step_bytes3),
            cost_estimate=pl.CostEstimate(
                flops=6 * rows * WCo, transcendentals=0,
                bytes_accessed=rows * WCo * (act_b + 2 * 4)),
        )(z2, x_flat, sc2, sh2)

    return out_flat.reshape(N, H, W, Cout)


def residual_plain_block(x_nchw, params, *, act_dtype=jnp.bfloat16,
                         mxu_dtype=None):
    """NCHW-compat wrapper matching the PyTorch module's layout.  The boundary
    transposes are the only NCHW<->NHWC traffic; layout-flexible callers should
    use residual_plain_block_nhwc directly."""
    x = jnp.transpose(x_nchw, (0, 2, 3, 1))
    out = residual_plain_block_nhwc(x, params, act_dtype=act_dtype,
                                    mxu_dtype=mxu_dtype)
    return jnp.transpose(out, (0, 3, 1, 2))


# ---------------------------------------------------------------------------
# Pure-JAX reference (exact PyTorch semantics, incl. the conv biases that the
# Pallas kernels drop because training-mode BN cancels them).
# ---------------------------------------------------------------------------
def residual_plain_block_ref(x_nchw, params):
    x = jnp.transpose(x_nchw, (0, 2, 3, 1)).astype(jnp.float32)

    def conv(a, w, b, pad):
        y = jax.lax.conv_general_dilated(
            a, w, window_strides=(1, 1), padding=((pad, pad), (pad, pad)),
            dimension_numbers=("NHWC", "HWIO", "NHWC"))
        return y + b

    def bn(y, g, be):
        m = jnp.mean(y, axis=(0, 1, 2), keepdims=True)
        v = jnp.mean((y - m) ** 2, axis=(0, 1, 2), keepdims=True)
        return (y - m) * jax.lax.rsqrt(v + EPS) * g + be

    y = jax.nn.relu(bn(conv(x, params["w1"], params["b1"], 1),
                       params["g1"], params["be1"]))
    y = jax.nn.relu(bn(conv(y, params["w2"], params["b2"], 1),
                       params["g2"], params["be2"]))
    if "ws" in params:
        ws = params["ws"].reshape(1, 1, *params["ws"].shape)
        sc = bn(conv(x, ws, params["bs"], 0), params["gs"], params["bes"])
    else:
        sc = x
    return jnp.transpose(y + sc, (0, 3, 1, 2))


# ---------------------------------------------------------------------------
if __name__ == "__main__":
    def make_params(key, cin, cout):
        ks = jax.random.split(key, 12)
        p = {
            "w1":  0.2 * jax.random.normal(ks[0], (3, 3, cin, cout), jnp.float32),
            "b1":  0.1 * jax.random.normal(ks[1], (cout,), jnp.float32),
            "g1":  1.0 + 0.1 * jax.random.normal(ks[2], (cout,), jnp.float32),
            "be1": 0.1 * jax.random.normal(ks[3], (cout,), jnp.float32),
            "w2":  0.2 * jax.random.normal(ks[4], (3, 3, cout, cout), jnp.float32),
            "b2":  0.1 * jax.random.normal(ks[5], (cout,), jnp.float32),
            "g2":  1.0 + 0.1 * jax.random.normal(ks[6], (cout,), jnp.float32),
            "be2": 0.1 * jax.random.normal(ks[7], (cout,), jnp.float32),
        }
        if cin != cout:  # projection shortcut: 1x1 conv (as (Cin, Cout)) + bn
            p.update({
                "ws":  0.2 * jax.random.normal(ks[8], (cin, cout), jnp.float32),
                "bs":  0.1 * jax.random.normal(ks[9], (cout,), jnp.float32),
                "gs":  1.0 + 0.1 * jax.random.normal(ks[10], (cout,), jnp.float32),
                "bes": 0.1 * jax.random.normal(ks[11], (cout,), jnp.float32),
            })
        return p

    N, IN_CH, OUT_CH, H, W = 2, 4, 8, 16, 16
    k_par_p, k_par_i, k_x_p, k_x_i = jax.random.split(jax.random.PRNGKey(0), 4)

    # --- projection-shortcut case (in_ch != out_ch) — the spec's shapes ------
    params_p = make_params(k_par_p, IN_CH, OUT_CH)
    x_p = jax.random.normal(k_x_p, (N, IN_CH, H, W), jnp.float32)
    ref_p = jax.block_until_ready(residual_plain_block_ref(x_p, params_p))

    # precise path: f32 activations, f32 matmuls -> tight tolerance
    out_f32 = jax.block_until_ready(
        residual_plain_block(x_p, params_p, act_dtype=jnp.float32))
    assert out_f32.shape == (N, OUT_CH, H, W), out_f32.shape
    err = float(jnp.max(jnp.abs(out_f32 - ref_p)))
    assert jnp.allclose(out_f32, ref_p, rtol=2e-3, atol=2e-3), err

    # default path: bf16 inter-stage activations (halved stage-boundary DMA)
    out_bf16 = jax.block_until_ready(residual_plain_block(x_p, params_p))
    err = float(jnp.max(jnp.abs(out_bf16 - ref_p)))
    assert jnp.allclose(out_bf16, ref_p, rtol=5e-2, atol=5e-2), err

    # --- identity-shortcut case (in_ch == out_ch) ----------------------------
    params_i = make_params(k_par_i, OUT_CH, OUT_CH)
    x_i = jax.random.normal(k_x_i, (N, OUT_CH, H, W), jnp.float32)
    ref_i = jax.block_until_ready(residual_plain_block_ref(x_i, params_i))
    out_i = jax.block_until_ready(
        residual_plain_block(x_i, params_i, act_dtype=jnp.float32))
    err = float(jnp.max(jnp.abs(out_i - ref_i)))
    assert jnp.allclose(out_i, ref_i, rtol=2e-3, atol=2e-3), err

    print("KERNEL_OK")
</pallas_src>

<mosaic_0001>
module attributes {stable_mosaic.version = 11 : i64} {
  func.func @_stage1_proj_kernel(%arg0: i32, %arg1: memref<16x64xf32, #tpu.memory_space<vmem>>, %arg2: memref<3x64x128xf32, #tpu.memory_space<vmem>>, %arg3: memref<64x128xf32, #tpu.memory_space<vmem>>, %arg4: memref<16x128xf32, #tpu.memory_space<vmem>>, %arg5: memref<16x128xf32, #tpu.memory_space<vmem>>, %arg6: memref<1x2x128xf32, #tpu.memory_space<vmem>>, %arg7: memref<1x2x128xf32, #tpu.memory_space<vmem>>) attributes {dimension_semantics = [#tpu.dimension_semantics<parallel>], iteration_bounds = array<i64: 2>, scalar_prefetch = 0 : i64, scratch_operands = 0 : i64, tpu.core_type = #tpu.core_type<tc>, window_params = [{transform_indices = @transform_0, window_bounds = array<i64: 16, 64>}, {pipeline_mode = #tpu.pipeline_mode<synchronous>, transform_indices = @transform_1, window_bounds = array<i64: 3, 64, 128>}, {pipeline_mode = #tpu.pipeline_mode<synchronous>, transform_indices = @transform_2, window_bounds = array<i64: 64, 128>}, {transform_indices = @transform_3, window_bounds = array<i64: 16, 128>}, {transform_indices = @transform_4, window_bounds = array<i64: 16, 128>}, {transform_indices = @transform_5, window_bounds = array<i64: 1, 2, 128>}, {transform_indices = @transform_6, window_bounds = array<i64: 1, 2, 128>}]} {
    %c0 = arith.constant 0 : index
    %c0_0 = arith.constant 0 : index
    %0 = vector.load %arg1[%c0, %c0_0] : memref<16x64xf32, #tpu.memory_space<vmem>>, vector<16x64xf32>
    %cst = arith.constant 0.000000e+00 : f32
    %1 = vector.broadcast %cst : f32 to vector<1x64xf32>
    %2 = vector.extract_strided_slice %0 {offsets = [0, 0], sizes = [15, 64], strides = [1, 1]} : vector<16x64xf32> to vector<15x64xf32>
    %3 = tpu.concatenate %1, %2 in 0 : vector<1x64xf32>, vector<15x64xf32> -> vector<16x64xf32>
    %4 = vector.extract_strided_slice %0 {offsets = [1, 0], sizes = [15, 64], strides = [1, 1]} : vector<16x64xf32> to vector<15x64xf32>
    %5 = tpu.concatenate %4, %1 in 0 : vector<15x64xf32>, vector<1x64xf32> -> vector<16x64xf32>
    %c0_1 = arith.constant 0 : index
    %c0_2 = arith.constant 0 : index
    %c0_3 = arith.constant 0 : index
    %6 = vector.load %arg2[%c0_1, %c0_2, %c0_3] : memref<3x64x128xf32, #tpu.memory_space<vmem>>, vector<1x64x128xf32>
    %7 = vector.shape_cast %6 : vector<1x64x128xf32> to vector<64x128xf32>
    %cst_4 = arith.constant dense<0.000000e+00> : vector<16x128xf32>
    %8 = tpu.matmul %3, %7, %cst_4 {dimension_numbers = #tpu.dot_dimension_numbers<[1], [0], [0], [1], [0, 0, 1, 1], [], []>} : vector<16x64xf32>, vector<64x128xf32>, vector<16x128xf32> -> vector<16x128xf32>
    %c1 = arith.constant 1 : index
    %c0_5 = arith.constant 0 : index
    %c0_6 = arith.constant 0 : index
    %9 = vector.load %arg2[%c1, %c0_5, %c0_6] : memref<3x64x128xf32, #tpu.memory_space<vmem>>, vector<1x64x128xf32>
    %10 = vector.shape_cast %9 : vector<1x64x128xf32> to vector<64x128xf32>
    %cst_7 = arith.constant dense<0.000000e+00> : vector<16x128xf32>
    %11 = tpu.matmul %0, %10, %cst_7 {dimension_numbers = #tpu.dot_dimension_numbers<[1], [0], [0], [1], [0, 0, 1, 1], [], []>} : vector<16x64xf32>, vector<64x128xf32>, vector<16x128xf32> -> vector<16x128xf32>
    %12 = arith.addf %8, %11 : vector<16x128xf32>
    %c2 = arith.constant 2 : index
    %c0_8 = arith.constant 0 : index
    %c0_9 = arith.constant 0 : index
    %13 = vector.load %arg2[%c2, %c0_8, %c0_9] : memref<3x64x128xf32, #tpu.memory_space<vmem>>, vector<1x64x128xf32>
    %14 = vector.shape_cast %13 : vector<1x64x128xf32> to vector<64x128xf32>
    %cst_10 = arith.constant dense<0.000000e+00> : vector<16x128xf32>
    %15 = tpu.matmul %5, %14, %cst_10 {dimension_numbers = #tpu.dot_dimension_numbers<[1], [0], [0], [1], [0, 0, 1, 1], [], []>} : vector<16x64xf32>, vector<64x128xf32>, vector<16x128xf32> -> vector<16x128xf32>
    %16 = arith.addf %12, %15 : vector<16x128xf32>
    %c0_11 = arith.constant 0 : index
    %c0_12 = arith.constant 0 : index
    %17 = vector.load %arg4[%c0_11, %c0_12] : memref<16x128xf32, #tpu.memory_space<vmem>>, vector<16x128xf32>
    tpu.vector_store %arg4[%c0_11, %c0_12], %16 {strides = array<i32>} : memref<16x128xf32, #tpu.memory_space<vmem>>, vector<16x128xf32>,
    %cst_13 = arith.constant dense<0.000000e+00> : vector<128xf32>
    %18 = vector.multi_reduction <add>, %16, %cst_13 [0] : vector<16x128xf32> to vector<128xf32>
    %19 = vector.shape_cast %18 : vector<128xf32> to vector<1x128xf32>
    %20 = arith.mulf %16, %16 : vector<16x128xf32>
    %cst_14 = arith.constant dense<0.000000e+00> : vector<128xf32>
    %21 = vector.multi_reduction <add>, %20, %cst_14 [0] : vector<16x128xf32> to vector<128xf32>
    %22 = vector.shape_cast %21 : vector<128xf32> to vector<1x128xf32>
    %23 = tpu.concatenate %19, %22 in 0 : vector<1x128xf32>, vector<1x128xf32> -> vector<2x128xf32>
    %24 = vector.shape_cast %23 : vector<2x128xf32> to vector<1x2x128xf32>
    %c0_15 = arith.constant 0 : index
    %c0_16 = arith.constant 0 : index
    %c0_17 = arith.constant 0 : index
    %25 = vector.load %arg6[%c0_15, %c0_16, %c0_17] : memref<1x2x128xf32, #tpu.memory_space<vmem>>, vector<1x2x128xf32>
    tpu.vector_store %arg6[%c0_15, %c0_16, %c0_17], %24 {strides = array<i32>} : memref<1x2x128xf32, #tpu.memory_space<vmem>>, vector<1x2x128xf32>,
    %c0_18 = arith.constant 0 : index
    %c0_19 = arith.constant 0 : index
    %26 = vector.load %arg3[%c0_18, %c0_19] : memref<64x128xf32, #tpu.memory_space<vmem>>, vector<64x128xf32>
    %cst_20 = arith.constant dense<0.000000e+00> : vector<16x128xf32>
    %27 = tpu.matmul %0, %26, %cst_20 {dimension_numbers = #tpu.dot_dimension_numbers<[1], [0], [0], [1], [0, 0, 1, 1], [], []>} : vector<16x64xf32>, vector<64x128xf32>, vector<16x128xf32> -> vector<16x128xf32>
    %c0_21 = arith.constant 0 : index
    %c0_22 = arith.constant 0 : index
    %28 = vector.load %arg5[%c0_21, %c0_22] : memref<16x128xf32, #tpu.memory_space<vmem>>, vector<16x128xf32>
    tpu.vector_store %arg5[%c0_21, %c0_22], %27 {strides = array<i32>} : memref<16x128xf32, #tpu.memory_space<vmem>>, vector<16x128xf32>,
    %cst_23 = arith.constant dense<0.000000e+00> : vector<128xf32>
    %29 = vector.multi_reduction <add>, %27, %cst_23 [0] : vector<16x128xf32> to vector<128xf32>
    %30 = vector.shape_cast %29 : vector<128xf32> to vector<1x128xf32>
    %31 = arith.mulf %27, %27 : vector<16x128xf32>
    %cst_24 = arith.constant dense<0.000000e+00> : vector<128xf32>
    %32 = vector.multi_reduction <add>, %31, %cst_24 [0] : vector<16x128xf32> to vector<128xf32>
    %33 = vector.shape_cast %32 : vector<128xf32> to vector<1x128xf32>
    %34 = tpu.concatenate %30, %33 in 0 : vector<1x128xf32>, vector<1x128xf32> -> vector<2x128xf32>
    %35 = vector.shape_cast %34 : vector<2x128xf32> to vector<1x2x128xf32>
    %c0_25 = arith.constant 0 : index
    %c0_26 = arith.constant 0 : index
    %c0_27 = arith.constant 0 : index
    %36 = vector.load %arg7[%c0_25, %c0_26, %c0_27] : memref<1x2x128xf32, #tpu.memory_space<vmem>>, vector<1x2x128xf32>
    tpu.vector_store %arg7[%c0_25, %c0_26, %c0_27], %35 {strides = array<i32>} : memref<1x2x128xf32, #tpu.memory_space<vmem>>, vector<1x2x128xf32>,
    return
  }
  func.func @transform_0(%arg0: i32) -> (i32, i32) {
    %c0_i32 = arith.constant 0 : i32
    %c0_i32_0 = arith.constant 0 : i32
    return %arg0, %c0_i32 : i32, i32
  }
  func.func @transform_1(%arg0: i32) -> (i32, i32, i32) {
    %c0_i32 = arith.constant 0 : i32
    %c0_i32_0 = arith.constant 0 : i32
    %c0_i32_1 = arith.constant 0 : i32
    %c0_i32_2 = arith.constant 0 : i32
    return %c0_i32, %c0_i32_0, %c0_i32_1 : i32, i32, i32
  }
  func.func @transform_2(%arg0: i32) -> (i32, i32) {
    %c0_i32 = arith.constant 0 : i32
    %c0_i32_0 = arith.constant 0 : i32
    %c0_i32_1 = arith.constant 0 : i32
    return %c0_i32, %c0_i32_0 : i32, i32
  }
  func.func @transform_3(%arg0: i32) -> (i32, i32) {
    %c0_i32 = arith.constant 0 : i32
    %c0_i32_0 = arith.constant 0 : i32
    return %arg0, %c0_i32 : i32, i32
  }
  func.func @transform_4(%arg0: i32) -> (i32, i32) {
    %c0_i32 = arith.constant 0 : i32
    %c0_i32_0 = arith.constant 0 : i32
    return %arg0, %c0_i32 : i32, i32
  }
  func.func @transform_5(%arg0: i32) -> (i32, i32, i32) {
    %c0_i32 = arith.constant 0 : i32
    %c0_i32_0 = arith.constant 0 : i32
    %c0_i32_1 = arith.constant 0 : i32
    return %arg0, %c0_i32, %c0_i32_0 : i32, i32, i32
  }
  func.func @transform_6(%arg0: i32) -> (i32, i32, i32) {
    %c0_i32 = arith.constant 0 : i32
    %c0_i32_0 = arith.constant 0 : i32
    %c0_i32_1 = arith.constant 0 : i32
    return %arg0, %c0_i32, %c0_i32_0 : i32, i32, i32
  }
}

</mosaic_0001>

<llo_original>
// kernel: tpu_custom_call.1
$region0: #{tpu_custom_call.1}
  #allocation0 [shape = 'u32[]', space=smem, size = 0x4, offset = 0x4, fixed_abs, tag = 'smem constant byte address 0x4 - core index']
  #allocation1 [shape = 'u32[144,128]{1,0:T(1,128)}', space=vmem, size = 0x12000, scoped, tag = 'internal scratch']
  %s0 = inlined_call_operand.hbm [shape: f32[32,64], index: 0, kind: input, shape index: {}]
  %s1 = inlined_call_operand.hbm [shape: f32[3,64,128], index: 1, kind: input, shape index: {}]
  %s2 = inlined_call_operand.hbm [shape: f32[64,128], index: 2, kind: input, shape index: {}]
  %s3 = inlined_call_operand.hbm [shape: f32[32,128], index: 3, kind: output, shape index: {0}]
  %s4 = inlined_call_operand.hbm [shape: f32[32,128], index: 4, kind: output, shape index: {1}]
  %s5 = inlined_call_operand.hbm [shape: f32[2,2,128], index: 5, kind: output, shape index: {2}]
  %s6 = inlined_call_operand.hbm [shape: f32[2,2,128], index: 6, kind: output, shape index: {3}]
  %7 = xla_tuple %s3, %s4, %s5, %s6
  %s8 = sld [smem:[#allocation0]]
  $region81: #{tpu_custom_call.1} parent=0
    _
  %s10 = ssub.s32 1, %s8
  %s11 = scalar_select 0, %s10, %s8
  $region1: #{tpu_custom_call.1} parent=0
    #allocation2 [shape = 'u8[16384]{0}', space=vmem, size = 0x4000, scoped, tag = 'input window, operand 0']
    #allocation3 [shape = 's32[2]{0}', space=sflag, size = 0x8, scoped, tag = 'scoped memory for tpu_custom_call.1']
    #allocation4 [shape = 's32[2]{0}', space=sflag, size = 0x8, scoped, tag = 'scoped memory for tpu_custom_call.1']
    #allocation5 [shape = 'u8[98304]{0}', space=vmem, size = 0x18000, scoped, tag = 'input window, operand 1, single buffered']
    #allocation6 [shape = 's32[1]{0}', space=sflag, size = 0x4, scoped, tag = 'scoped memory for tpu_custom_call.1']
    #allocation7 [shape = 'u8[32768]{0}', space=vmem, size = 0x8000, scoped, tag = 'input window, operand 2, single buffered']
    #allocation8 [shape = 'u8[16384]{0}', space=vmem, size = 0x4000, scoped, tag = 'output window, operand 0']
    #allocation9 [shape = 'u8[16384]{0}', space=vmem, size = 0x4000, scoped, tag = 'output window, operand 1']
    #allocation10 [shape = 's32[2]{0}', space=sflag, size = 0x8, scoped, tag = 'scoped memory for tpu_custom_call.1']
    #allocation11 [shape = 'u8[2048]{0}', space=vmem, size = 0x800, scoped, tag = 'output window, operand 2']
    #allocation12 [shape = 'u8[2048]{0}', space=vmem, size = 0x800, scoped, tag = 'output window, operand 3']
    #allocation13 [shape = 's32[2]{0}', space=sflag, size = 0x8, scoped, tag = 'scoped memory for tpu_custom_call.1']
    %12 = vsyncpa [#allocation3], 0
    %s13 = scalar_lea.sflag [#allocation3], 1
    %14 = vsyncpa %s13, 0
    %15 = vsyncpa [#allocation6], 0
    %16 = vsyncpa [#allocation4], 0
    %s17 = scalar_lea.sflag [#allocation4], 1
    %18 = vsyncpa %s17, 0
    %19 = vsyncpa [#allocation10], 0
    %s20 = scalar_lea.sflag [#allocation10], 1
    %21 = vsyncpa %s20, 0
    %22 = vsyncpa [#allocation13], 0
    %s23 = scalar_lea.sflag [#allocation13], 1
    %24 = vsyncpa %s23, 0
    loop: start=0, step=1, limit=4
    $region2: #{tpu_custom_call.1} parent=1 // loop_pre_header
      _
    $region3: #{tpu_custom_call.1} parent=1 // loop_header
      %s26 = sphi 0, %s30
      %p27 = scmp.ge.s32.totalorder %s26, 4
      %s36 = sphi 0, %s38
      %s39 = sphi 0, %s36
      %s40 = sphi 0, %s39
      %s56 = sphi 0, %s40
      %s60 = sphi 0, %s60
      %s62 = sphi 0, %s60
      %s63 = sphi 0, %s62
      %s77 = sphi 0, %s63
      %s81 = sphi 0, %s81
      %s83 = sphi 0, %s81
      %s84 = sphi 0, %s83
      %s98 = sphi 0, %s84
      %s104 = sphi 0, %s106
      %s107 = sphi 0, %s104
      %s108 = sphi 0, %s107
      %s124 = sphi 0, %s108
      %s130 = sphi 0, %s132
      %s133 = sphi 0, %s130
      %s134 = sphi 0, %s133
      %s150 = sphi 0, %s134
      %s156 = sphi 0, %s158
      %s159 = sphi 0, %s156
      %s160 = sphi 0, %s159
      %s176 = sphi 0, %s160
      %s182 = sphi 0, %s184
      %s185 = sphi 0, %s182
      %s186 = sphi 0, %s185
      %s202 = sphi 0, %s186
    $region4: #{tpu_custom_call.1} parent=1 // loop_header_branch
      %29 = sbr.rel (%p27) target = $region8
    $region5: #{tpu_custom_call.1} parent=1 // loop_body
      %s31 = ssub.s32 %s26, 1
      %s32 = ssub.s32 %s26, 2
      %s33 = sadd.s32 %s26, 1
      %s34 = ssub.s32 %s26, %s33
      %p35 = scmp.eq.s32.totalorder %s34, 0
      %s37 = sadd.s32 %s36, 1
      %s38 = scalar_select %p35, %s36, %s37
      %p41 = pneg %p35
      %p42 = scmp.eq.s32.totalorder %s26, 1
      %p43 = por %p41, %p42
      %p44 = scmp.ne.s32.totalorder %s36, %s39
      %p45 = scmp.eq.s32.totalorder %s26, 0
      %p46 = por %p44, %p45
      %p47 = scmp.ne.s32.totalorder %s36, %s39
      %p48 = scmp.eq.s32.totalorder %s31, 1
      %p49 = por %p47, %p48
      %p50 = scmp.ne.s32.totalorder %s39, %s40
      %p51 = scmp.eq.s32.totalorder %s31, 0
      %p52 = por %p50, %p51
      %p53 = scmp.ne.s32.totalorder %s39, %s40
      %p54 = scmp.eq.s32.totalorder %s32, 1
      %p55 = por %p53, %p54
      %p57 = scmp.ne.s32.totalorder %s40, %s56
      %p58 = scmp.eq.s32.totalorder %s32, 0
      %p59 = por %p57, %p58
      %s61 = sadd.s32 %s60, 1
      %p64 = scmp.eq.s32.totalorder %s26, 1
      %p65 = scmp.ne.s32.totalorder %s60, %s62
      %p66 = scmp.eq.s32.totalorder %s26, 0
      %p67 = por %p65, %p66
      %p68 = scmp.ne.s32.totalorder %s60, %s62
      %p69 = scmp.eq.s32.totalorder %s31, 1
      %p70 = por %p68, %p69
      %p71 = scmp.ne.s32.totalorder %s62, %s63
      %p72 = scmp.eq.s32.totalorder %s31, 0
      %p73 = por %p71, %p72
      %p74 = scmp.ne.s32.totalorder %s62, %s63
      %p75 = scmp.eq.s32.totalorder %s32, 1
      %p76 = por %p74, %p75
      %p78 = scmp.ne.s32.totalorder %s63, %s77
      %p79 = scmp.eq.s32.totalorder %s32, 0
      %p80 = por %p78, %p79
      %s82 = sadd.s32 %s81, 1
      %p85 = scmp.eq.s32.totalorder %s26, 1
      %p86 = scmp.ne.s32.totalorder %s81, %s83
      %p87 = scmp.eq.s32.totalorder %s26, 0
      %p88 = por %p86, %p87
      %p89 = scmp.ne.s32.totalorder %s81, %s83
      %p90 = scmp.eq.s32.totalorder %s31, 1
      %p91 = por %p89, %p90
      %p92 = scmp.ne.s32.totalorder %s83, %s84
      %p93 = scmp.eq.s32.totalorder %s31, 0
      %p94 = por %p92, %p93
      %p95 = scmp.ne.s32.totalorder %s83, %s84
      %p96 = scmp.eq.s32.totalorder %s32, 1
      %p97 = por %p95, %p96
      %p99 = scmp.ne.s32.totalorder %s84, %s98
      %p100 = scmp.eq.s32.totalorder %s32, 0
      %p101 = por %p99, %p100
      %s102 = ssub.s32 %s26, %s33
      %p103 = scmp.eq.s32.totalorder %s102, 0
      %s105 = sadd.s32 %s104, 1
      %s106 = scalar_select %p103, %s104, %s105
      %p109 = pneg %p103
      %p110 = scmp.eq.s32.totalorder %s26, 1
      %p111 = por %p109, %p110
      %p112 = scmp.ne.s32.totalorder %s104, %s107
      %p113 = scmp.eq.s32.totalorder %s26, 0
      %p114 = por %p112, %p113
      %p115 = scmp.ne.s32.totalorder %s104, %s107
      %p116 = scmp.eq.s32.totalorder %s31, 1
      %p117 = por %p115, %p116
      %p118 = scmp.ne.s32.totalorder %s107, %s108
      %p119 = scmp.eq.s32.totalorder %s31, 0
      %p120 = por %p118, %p119
      %p121 = scmp.ne.s32.totalorder %s107, %s108
      %p122 = scmp.eq.s32.totalorder %s32, 1
      %p123 = por %p121, %p122
      %p125 = scmp.ne.s32.totalorder %s108, %s124
      %p126 = scmp.eq.s32.totalorder %s32, 0
      %p127 = por %p125, %p126
      %s128 = ssub.s32 %s26, %s33
      %p129 = scmp.eq.s32.totalorder %s128, 0
      %s131 = sadd.s32 %s130, 1
      %s132 = scalar_select %p129, %s130, %s131
      %p135 = pneg %p129
      %p136 = scmp.eq.s32.totalorder %s26, 1
      %p137 = por %p135, %p136
      %p138 = scmp.ne.s32.totalorder %s130, %s133
      %p139 = scmp.eq.s32.totalorder %s26, 0
      %p140 = por %p138, %p139
      %p141 = scmp.ne.s32.totalorder %s130, %s133
      %p142 = scmp.eq.s32.totalorder %s31, 1
      %p143 = por %p141, %p142
      %p144 = scmp.ne.s32.totalorder %s133, %s134
      %p145 = scmp.eq.s32.totalorder %s31, 0
      %p146 = por %p144, %p145
      %p147 = scmp.ne.s32.totalorder %s133, %s134
      %p148 = scmp.eq.s32.totalorder %s32, 1
      %p149 = por %p147, %p148
      %p151 = scmp.ne.s32.totalorder %s134, %s150
      %p152 = scmp.eq.s32.totalorder %s32, 0
      %p153 = por %p151, %p152
      %s154 = ssub.s32 %s26, %s33
      %p155 = scmp.eq.s32.totalorder %s154, 0
      %s157 = sadd.s32 %s156, 1
      %s158 = scalar_select %p155, %s156, %s157
      %p161 = pneg %p155
      %p162 = scmp.eq.s32.totalorder %s26, 1
      %p163 = por %p161, %p162
      %p164 = scmp.ne.s32.totalorder %s156, %s159
      %p165 = scmp.eq.s32.totalorder %s26, 0
      %p166 = por %p164, %p165
      %p167 = scmp.ne.s32.totalorder %s156, %s159
      %p168 = scmp.eq.s32.totalorder %s31, 1
      %p169 = por %p167, %p168
      %p170 = scmp.ne.s32.totalorder %s159, %s160
      %p171 = scmp.eq.s32.totalorder %s31, 0
      %p172 = por %p170, %p171
      %p173 = scmp.ne.s32.totalorder %s159, %s160
      %p174 = scmp.eq.s32.totalorder %s32, 1
      %p175 = por %p173, %p174
      %p177 = scmp.ne.s32.totalorder %s160, %s176
      %p178 = scmp.eq.s32.totalorder %s32, 0
      %p179 = por %p177, %p178
      %s180 = ssub.s32 %s26, %s33
      %p181 = scmp.eq.s32.totalorder %s180, 0
      %s183 = sadd.s32 %s182, 1
      %s184 = scalar_select %p181, %s182, %s183
      %p187 = pneg %p181
      %p188 = scmp.eq.s32.totalorder %s26, 1
      %p189 = por %p187, %p188
      %p190 = scmp.ne.s32.totalorder %s182, %s185
      %p191 = scmp.eq.s32.totalorder %s26, 0
      %p192 = por %p190, %p191
      %p193 = scmp.ne.s32.totalorder %s182, %s185
      %p194 = scmp.eq.s32.totalorder %s31, 1
      %p195 = por %p193, %p194
      %p196 = scmp.ne.s32.totalorder %s185, %s186
      %p197 = scmp.eq.s32.totalorder %s31, 0
      %p198 = por %p196, %p197
      %p199 = scmp.ne.s32.totalorder %s185, %s186
      %p200 = scmp.eq.s32.totalorder %s32, 1
      %p201 = por %p199, %p200
      %p203 = scmp.ne.s32.totalorder %s186, %s202
      %p204 = scmp.eq.s32.totalorder %s32, 0
      %p205 = por %p203, %p204
      %p206 = scmp.le.s32.totalorder 1, %s26
      %p207 = scmp.lt.s32.totalorder %s26, 3
      %p208 = pnand %p206, %p207
      %p209 = pneg %p208
      // Predicated region
      $region9: #{tpu_custom_call.1} parent=5 // pred_check
        _
      $region10: #{tpu_custom_call.1} parent=5 // pred_check_branch
        %211 = sbr.rel (%p208) target = $region12
      $region11: #{tpu_custom_call.1} parent=5 // pred_region
        %s212 = ssub.s32 %s26, 1
        // Predicated region
        $region13: #{tpu_custom_call.1} parent=11 // pred_check
          %p213 = pneg %p73
        $region14: #{tpu_custom_call.1} parent=11 // pred_check_branch
          %215 = sbr.rel (%p213) target = $region16
        $region15: #{tpu_custom_call.1} parent=11 // pred_region
          %s217 = ssub.s32 3072, 3072
          %218 = vsyncadd [#allocation6], %s217
          %s219 = sshll.u32 [#allocation5], 4
          %s220 = int_to_ptr.vmem [resolvable:$true] %s219
          %225 = dma.hbm_to_vmem [thread:$0]  %s1, 3072, %s220, [#allocation6], 128, 128, 8
        $region16: #{tpu_custom_call.1} parent=11 // pred_fallthru
          _
        // Predicated region
        $region17: #{tpu_custom_call.1} parent=11 // pred_check
          %p226 = pneg %p94
        $region18: #{tpu_custom_call.1} parent=11 // pred_check_branch
          %228 = sbr.rel (%p226) target = $region20
        $region19: #{tpu_custom_call.1} parent=11 // pred_region
          %s230 = ssub.s32 1024, 1024
          %231 = vsyncadd [#allocation6], %s230
          %s232 = sshll.u32 [#allocation7], 4
          %s233 = int_to_ptr.vmem [resolvable:$true] %s232
          %238 = dma.hbm_to_vmem [thread:$0]  %s2, 1024, %s233, [#allocation6], 128, 128, 8
        $region20: #{tpu_custom_call.1} parent=11 // pred_fallthru
          _
      $region12: #{tpu_custom_call.1} parent=5 // pred_fallthru
        _
      %p239 = scmp.lt.s32.totalorder %s26, 2
      // Predicated region
      $region21: #{tpu_custom_call.1} parent=5 // pred_check
        %p240 = pneg %p239
      $region22: #{tpu_custom_call.1} parent=5 // pred_check_branch
        %242 = sbr.rel (%p240) target = $region24
      $region23: #{tpu_custom_call.1} parent=5 // pred_region
        // Predicated region
        $region25: #{tpu_custom_call.1} parent=23 // pred_check
          %p243 = pneg %p46
        $region26: #{tpu_custom_call.1} parent=23 // pred_check_branch
          %245 = sbr.rel (%p243) target = $region28
        $region27: #{tpu_custom_call.1} parent=23 // pred_region
          %s246 = sand.u32 %s36, 1
          %s247 = scalar_lea.sflag [#allocation3], %s246
          %s248 = sand.u32 %s36, 1
          %s249 = smul.addr %s248, 16
          %s250 = scalar_lea.vmem [#allocation2], %s249
          %s251 = smul.u32 2, %s26
          %s253 = ssub.s32 256, 256
          %254 = vsyncadd %s247, %s253
          %s255 = smul.addr %s251, 128
          %s256 = scalar_lea.hbm %s0, %s255
          %s257 = sshll.u32 %s250, 4
          %s258 = int_to_ptr.vmem [resolvable:$true] %s257
          %263 = dma.hbm_to_vmem [thread:$0]  %s256, 256, %s258, %s247, 128, 128, 8
        $region28: #{tpu_custom_call.1} parent=23 // pred_fallthru
          _
      $region24: #{tpu_custom_call.1} parent=5 // pred_fallthru
        _
      %p264 = scmp.le.s32.totalorder 1, %s26
      %p265 = scmp.lt.s32.totalorder %s26, 3
      %p266 = pnand %p264, %p265
      %p267 = pneg %p266
      // Predicated region
      $region29: #{tpu_custom_call.1} parent=5 // pred_check
        _
      $region30: #{tpu_custom_call.1} parent=5 // pred_check_branch
        %269 = sbr.rel (%p266) target = $region32
      $region31: #{tpu_custom_call.1} parent=5 // pred_region
        %s270 = ssub.s32 %s26, 1
        %s271 = sand.u32 %s39, 1
        %s272 = scalar_lea.sflag [#allocation3], %s271
        %s273 = sand.u32 %s39, 1
        %s274 = smul.addr %s273, 16
        %s275 = scalar_lea.vmem [#allocation2], %s274
        // Predicated region
        $region33: #{tpu_custom_call.1} parent=31 // pred_check
          %p276 = pneg %p52
        $region34: #{tpu_custom_call.1} parent=31 // pred_check_branch
          %278 = sbr.rel (%p276) target = $region36
        $region35: #{tpu_custom_call.1} parent=31 // pred_region
          %279 = dma.done %s272, 256
        $region36: #{tpu_custom_call.1} parent=31 // pred_fallthru
          _
        // Predicated region
        $region37: #{tpu_custom_call.1} parent=31 // pred_check
          %p280 = pneg %p73
        $region38: #{tpu_custom_call.1} parent=31 // pred_check_branch
          %282 = sbr.rel (%p280) target = $region40
        $region39: #{tpu_custom_call.1} parent=31 // pred_region
          %283 = dma.done [#allocation6], 3072
        $region40: #{tpu_custom_call.1} parent=31 // pred_fallthru
          _
        // Predicated region
        $region41: #{tpu_custom_call.1} parent=31 // pred_check
          %p284 = pneg %p94
        $region42: #{tpu_custom_call.1} parent=31 // pred_check_branch
          %286 = sbr.rel (%p284) target = $region44
        $region43: #{tpu_custom_call.1} parent=31 // pred_region
          %287 = dma.done [#allocation6], 1024
        $region44: #{tpu_custom_call.1} parent=31 // pred_fallthru
          _
        %s288 = sand.u32 %s39, 1
        %s289 = scalar_lea.sflag [#allocation3], %s288
        %s290 = sand.u32 %s39, 1
        %s291 = smul.addr %s290, 16
        %s292 = scalar_lea.vmem [#allocation2], %s291
        %p293 = pneg %p52
        %p294 = pneg %p49
        %p295 = pneg %p73
        %p296 = pneg %p70
        %p297 = pneg %p94
        %p298 = pneg %p91
        %p299 = pneg %p120
        %p300 = pneg %p117
        %s301 = sand.u32 %s107, 1
        %s302 = scalar_lea.sflag [#allocation4], %s301
        %s303 = sand.u32 %s107, 1
        %s304 = smul.addr %s303, 16
        %s305 = scalar_lea.vmem [#allocation8], %s304
        %p306 = pneg %p146
        %p307 = pneg %p143
        %s308 = sand.u32 %s31, 1
        %s309 = scalar_lea.sflag [#allocation10], %s308
        %s310 = sand.u32 %s133, 1
        %s311 = smul.addr %s310, 16
        %s312 = scalar_lea.vmem [#allocation9], %s311
        %p313 = pneg %p172
        %p314 = pneg %p169
        %s315 = sand.u32 %s31, 1
        %s316 = scalar_lea.sflag [#allocation10], %s315
        %s317 = sand.u32 %s159, 1
        %s318 = smul.addr %s317, 2
        %s319 = scalar_lea.vmem [#allocation11], %s318
        %p320 = pneg %p198
        %p321 = pneg %p195
        %s322 = sand.u32 %s185, 1
        %s323 = scalar_lea.sflag [#allocation13], %s322
        %s324 = sand.u32 %s185, 1
        %s325 = smul.addr %s324, 2
        %s326 = scalar_lea.vmem [#allocation12], %s325
        %s327 = smul.u32 2, %s31
        %s328 = smul.u32 2, %s31
        %s329 = smul.u32 2, %s31
        %v330 = vld [vmem:[%s275] sm:$0xff]
        %v331 = vld [vmem:[%s275 + $0x8] sm:$0xff]
        %vm334 = vcmask 1040384
        %v335 = vrot.slane %v330, 7
        %v336 = vrot.slane %v331, 7
        %v337 = vsel %vm334, %v335, %v336
        %v339 = vsel %vm334, 0.0, %v335
        %vm340 = vcmask 1046528
        %v341 = vrot.slane %v330, 1
        %v342 = vrot.slane %v331, 1
        %v343 = vsel %vm340, %v341, %v342
        %v345 = vsel %vm340, %v342, 0.0
        %v346 = vld [vmem:[#allocation5] sm:$0xff]
        %v347 = vld [vmem:[#allocation5 + $0x8] sm:$0xff]
        %v348 = vld [vmem:[#allocation5 + $0x10] sm:$0xff]
        %v349 = vld [vmem:[#allocation5 + $0x18] sm:$0xff]
        %v350 = vld [vmem:[#allocation5 + $0x20] sm:$0xff]
        %v351 = vld [vmem:[#allocation5 + $0x28] sm:$0xff]
        %v352 = vld [vmem:[#allocation5 + $0x30] sm:$0xff]
        %v353 = vld [vmem:[#allocation5 + $0x38] sm:$0xff]
        %s354 = scalar_lea.vmem [#allocation5], 64
        %v355 = vld [vmem:[%s354] sm:$0xff]
        %v356 = vld [vmem:[%s354 + $0x8] sm:$0xff]
        %v357 = vld [vmem:[%s354 + $0x10] sm:$0xff]
        %v358 = vld [vmem:[%s354 + $0x18] sm:$0xff]
        %v359 = vld [vmem:[%s354 + $0x20] sm:$0xff]
        %v360 = vld [vmem:[%s354 + $0x28] sm:$0xff]
        %v361 = vld [vmem:[%s354 + $0x30] sm:$0xff]
        %v362 = vld [vmem:[%s354 + $0x38] sm:$0xff]
        %vm363 = vcmask 523264
        %v364 = vsel %vm363, %v330, 0
        %v366 = vsel %vm363, %v331, 0
        %368 = vmatprep.subr.mxu0 0.0
        %369 = vmatpush1.msra.mxu0 0.0
        %370 = vmatprep.subr.mxu0 0.0
        %371 = vmatpush1.msra.mxu0 0.0
        %372 = vmatprep.subr.mxu0 0.0
        %373 = vmatpush1.msra.mxu0 0.0
        %374 = vmatprep.subr.mxu0 0.0
        %375 = vmatpush1.msra.mxu0 0.0
        %376 = vmatprep.subr.mxu0 0.0
        %377 = vmatpush1.msra.mxu0 0.0
        %378 = vmatprep.subr.mxu0 0.0
        %379 = vmatpush1.msra.mxu0 0.0
        %380 = vmatprep.subr.mxu0 0.0
        %381 = vmatpush1.msra.mxu0 0.0
        %382 = vmatprep.subr.mxu0 0.0
        %383 = vmatpush1.msra.mxu0 0.0
        %384 = vmatprep.subr.mxu0 0.0
        %385 = vmatpush1.msra.mxu0 %v362
        %386 = vmatprep.subr.mxu0 0.0
        %387 = vmatpush1.msra.mxu0 %v361
        %388 = vmatprep.subr.mxu0 0.0
        %389 = vmatpush1.msra.mxu0 %v360
        %390 = vmatprep.subr.mxu0 0.0
        %391 = vmatpush1.msra.mxu0 %v359
        %392 = vmatprep.subr.mxu0 0.0
        %393 = vmatpush1.msra.mxu0 %v358
        %394 = vmatprep.subr.mxu0 0.0
        %395 = vmatpush1.msra.mxu0 %v357
        %396 = vmatprep.subr.mxu0 0.0
        %397 = vmatpush1.msra.mxu0 %v356
        %398 = vmatprep.subr.mxu0 0.0
        %399 = vmatpush1.msra.mxu0 %v355
        %400 = vmatprep.subr.mxu0 0.0
        %401 = vmatpush2.msra.mxu0 0.0
        %402 = vmatprep.subr.mxu0 0.0
        %403 = vmatpush2.msra.mxu0 0.0
        %404 = vmatprep.subr.mxu0 0.0
        %405 = vmatpush2.msra.mxu0 0.0
        %406 = vmatprep.subr.mxu0 0.0
        %407 = vmatpush2.msra.mxu0 0.0
        %408 = vmatprep.subr.mxu0 0.0
        %409 = vmatpush2.msra.mxu0 0.0
        %410 = vmatprep.subr.mxu0 0.0
        %411 = vmatpush2.msra.mxu0 0.0
        %412 = vmatprep.subr.mxu0 0.0
        %413 = vmatpush2.msra.mxu0 0.0
        %414 = vmatprep.subr.mxu0 0.0
        %415 = vmatpush2.msra.mxu0 0.0
        %416 = vmatprep.subr.mxu0 0.0
        %417 = vmatpush2.msra.mxu0 0.0
        %418 = vmatprep.subr.mxu0 0.0
        %419 = vmatpush2.msra.mxu0 0.0
        %420 = vmatprep.subr.mxu0 0.0
        %421 = vmatpush2.msra.mxu0 0.0
        %422 = vmatprep.subr.mxu0 0.0
        %423 = vmatpush2.msra.mxu0 0.0
        %424 = vmatprep.subr.mxu0 0.0
        %425 = vmatpush2.msra.mxu0 0.0
        %426 = vmatprep.subr.mxu0 0.0
        %427 = vmatpush2.msra.mxu0 0.0
        %428 = vmatprep.subr.mxu0 0.0
        %429 = vmatpush2.msra.mxu0 0.0
        %430 = vmatprep.subr.mxu0 0.0
        %431 = vmatpush2.msra.mxu0 0.0
        %432 = vmatprep.mubr.f32.mxu0 0.0
        %433 = vmatmul.mubr.f32.gmra.mxu0 %v364
        %v434 = vpop.f32.mrf.mxu0
        %v435 = vadd.f32 0.0, %v434
        %v436 = vpop.f32.mrf.mxu0
        %437 = vmatprep.mubr.f32.mxu0 0.0
        %438 = vmatmul.mubr.f32.gmra.mxu0 %v366
        %v439 = vpop.f32.mrf.mxu0
        %v440 = vadd.f32 0.0, %v439
        %v441 = vpop.f32.mrf.mxu0
        %442 = vdwg.mxu0
        %v444 = vsel %vm363, %v339, 0
        %v446 = vsel %vm363, %v337, 0
        %448 = vmatprep.subr.mxu0 0.0
        %449 = vmatpush1.msra.mxu0 0.0
        %450 = vmatprep.subr.mxu0 0.0
        %451 = vmatpush1.msra.mxu0 0.0
        %452 = vmatprep.subr.mxu0 0.0
        %453 = vmatpush1.msra.mxu0 0.0
        %454 = vmatprep.subr.mxu0 0.0
        %455 = vmatpush1.msra.mxu0 0.0
        %456 = vmatprep.subr.mxu0 0.0
        %457 = vmatpush1.msra.mxu0 0.0
        %458 = vmatprep.subr.mxu0 0.0
        %459 = vmatpush1.msra.mxu0 0.0
        %460 = vmatprep.subr.mxu0 0.0
        %461 = vmatpush1.msra.mxu0 0.0
        %462 = vmatprep.subr.mxu0 0.0
        %463 = vmatpush1.msra.mxu0 0.0
        %464 = vmatprep.subr.mxu0 0.0
        %465 = vmatpush1.msra.mxu0 %v353
        %466 = vmatprep.subr.mxu0 0.0
        %467 = vmatpush1.msra.mxu0 %v352
        %468 = vmatprep.subr.mxu0 0.0
        %469 = vmatpush1.msra.mxu0 %v351
        %470 = vmatprep.subr.mxu0 0.0
        %471 = vmatpush1.msra.mxu0 %v350
        %472 = vmatprep.subr.mxu0 0.0
        %473 = vmatpush1.msra.mxu0 %v349
        %474 = vmatprep.subr.mxu0 0.0
        %475 = vmatpush1.msra.mxu0 %v348
        %476 = vmatprep.subr.mxu0 0.0
        %477 = vmatpush1.msra.mxu0 %v347
        %478 = vmatprep.subr.mxu0 0.0
        %479 = vmatpush1.msra.mxu0 %v346
        %480 = vmatprep.subr.mxu0 0.0
        %481 = vmatpush2.msra.mxu0 0.0
        %482 = vmatprep.subr.mxu0 0.0
        %483 = vmatpush2.msra.mxu0 0.0
        %484 = vmatprep.subr.mxu0 0.0
        %485 = vmatpush2.msra.mxu0 0.0
        %486 = vmatprep.subr.mxu0 0.0
        %487 = vmatpush2.msra.mxu0 0.0
        %488 = vmatprep.subr.mxu0 0.0
        %489 = vmatpush2.msra.mxu0 0.0
        %490 = vmatprep.subr.mxu0 0.0
        %491 = vmatpush2.msra.mxu0 0.0
        %492 = vmatprep.subr.mxu0 0.0
        %493 = vmatpush2.msra.mxu0 0.0
        %494 = vmatprep.subr.mxu0 0.0
        %495 = vmatpush2.msra.mxu0 0.0
        %496 = vmatprep.subr.mxu0 0.0
        %497 = vmatpush2.msra.mxu0 0.0
        %498 = vmatprep.subr.mxu0 0.0
        %499 = vmatpush2.msra.mxu0 0.0
        %500 = vmatprep.subr.mxu0 0.0
        %501 = vmatpush2.msra.mxu0 0.0
        %502 = vmatprep.subr.mxu0 0.0
        %503 = vmatpush2.msra.mxu0 0.0
        %504 = vmatprep.subr.mxu0 0.0
        %505 = vmatpush2.msra.mxu0 0.0
        %506 = vmatprep.subr.mxu0 0.0
        %507 = vmatpush2.msra.mxu0 0.0
        %508 = vmatprep.subr.mxu0 0.0
        %509 = vmatpush2.msra.mxu0 0.0
        %510 = vmatprep.subr.mxu0 0.0
        %511 = vmatpush2.msra.mxu0 0.0
        %512 = vmatprep.mubr.f32.mxu0 0.0
        %513 = vmatmul.mubr.f32.gmra.mxu0 %v444
        %v514 = vpop.f32.mrf.mxu0
        %v515 = vadd.f32 %v435, %v514
        %v516 = vpop.f32.mrf.mxu0
        %517 = vmatprep.mubr.f32.mxu0 0.0
        %518 = vmatmul.mubr.f32.gmra.mxu0 %v446
        %v519 = vpop.f32.mrf.mxu0
        %v520 = vadd.f32 %v440, %v519
        %v521 = vpop.f32.mrf.mxu0
        %522 = vdwg.mxu0
        %s523 = scalar_lea.vmem [#allocation5], 128
        %v524 = vld [vmem:[%s523] sm:$0xff]
        %v525 = vld [vmem:[%s523 + $0x8] sm:$0xff]
        %v526 = vld [vmem:[%s523 + $0x10] sm:$0xff]
        %v527 = vld [vmem:[%s523 + $0x18] sm:$0xff]
        %v528 = vld [vmem:[%s523 + $0x20] sm:$0xff]
        %v529 = vld [vmem:[%s523 + $0x28] sm:$0xff]
        %v530 = vld [vmem:[%s523 + $0x30] sm:$0xff]
        %v531 = vld [vmem:[%s523 + $0x38] sm:$0xff]
        %v532 = vsel %vm363, %v343, 0
        %v535 = vsel %vm363, %v345, 0
        %537 = vmatprep.subr.mxu0 0.0
        %538 = vmatpush1.msra.mxu0 0.0
        %539 = vmatprep.subr.mxu0 0.0
        %540 = vmatpush1.msra.mxu0 0.0
        %541 = vmatprep.subr.mxu0 0.0
        %542 = vmatpush1.msra.mxu0 0.0
        %543 = vmatprep.subr.mxu0 0.0
        %544 = vmatpush1.msra.mxu0 0.0
        %545 = vmatprep.subr.mxu0 0.0
        %546 = vmatpush1.msra.mxu0 0.0
        %547 = vmatprep.subr.mxu0 0.0
        %548 = vmatpush1.msra.mxu0 0.0
        %549 = vmatprep.subr.mxu0 0.0
        %550 = vmatpush1.msra.mxu0 0.0
        %551 = vmatprep.subr.mxu0 0.0
        %552 = vmatpush1.msra.mxu0 0.0
        %553 = vmatprep.subr.mxu0 0.0
        %554 = vmatpush1.msra.mxu0 %v531
        %555 = vmatprep.subr.mxu0 0.0
        %556 = vmatpush1.msra.mxu0 %v530
        %557 = vmatprep.subr.mxu0 0.0
        %558 = vmatpush1.msra.mxu0 %v529
        %559 = vmatprep.subr.mxu0 0.0
        %560 = vmatpush1.msra.mxu0 %v528
        %561 = vmatprep.subr.mxu0 0.0
        %562 = vmatpush1.msra.mxu0 %v527
        %563 = vmatprep.subr.mxu0 0.0
        %564 = vmatpush1.msra.mxu0 %v526
        %565 = vmatprep.subr.mxu0 0.0
        %566 = vmatpush1.msra.mxu0 %v525
        %567 = vmatprep.subr.mxu0 0.0
        %568 = vmatpush1.msra.mxu0 %v524
        %569 = vmatprep.subr.mxu0 0.0
        %570 = vmatpush2.msra.mxu0 0.0
        %571 = vmatprep.subr.mxu0 0.0
        %572 = vmatpush2.msra.mxu0 0.0
        %573 = vmatprep.subr.mxu0 0.0
        %574 = vmatpush2.msra.mxu0 0.0
        %575 = vmatprep.subr.mxu0 0.0
        %576 = vmatpush2.msra.mxu0 0.0
        %577 = vmatprep.subr.mxu0 0.0
        %578 = vmatpush2.msra.mxu0 0.0
        %579 = vmatprep.subr.mxu0 0.0
        %580 = vmatpush2.msra.mxu0 0.0
        %581 = vmatprep.subr.mxu0 0.0
        %582 = vmatpush2.msra.mxu0 0.0
        %583 = vmatprep.subr.mxu0 0.0
        %584 = vmatpush2.msra.mxu0 0.0
        %585 = vmatprep.subr.mxu0 0.0
        %586 = vmatpush2.msra.mxu0 0.0
        %587 = vmatprep.subr.mxu0 0.0
        %588 = vmatpush2.msra.mxu0 0.0
        %589 = vmatprep.subr.mxu0 0.0
        %590 = vmatpush2.msra.mxu0 0.0
        %591 = vmatprep.subr.mxu0 0.0
        %592 = vmatpush2.msra.mxu0 0.0
        %593 = vmatprep.subr.mxu0 0.0
        %594 = vmatpush2.msra.mxu0 0.0
        %595 = vmatprep.subr.mxu0 0.0
        %596 = vmatpush2.msra.mxu0 0.0
        %597 = vmatprep.subr.mxu0 0.0
        %598 = vmatpush2.msra.mxu0 0.0
        %599 = vmatprep.subr.mxu0 0.0
        %600 = vmatpush2.msra.mxu0 0.0
        %601 = vmatprep.mubr.f32.mxu0 0.0
        %602 = vmatmul.mubr.f32.gmra.mxu0 %v532
        %v603 = vpop.f32.mrf.mxu0
        %v604 = vadd.f32 0.0, %v603
        %v605 = vpop.f32.mrf.mxu0
        %606 = vmatprep.mubr.f32.mxu0 0.0
        %607 = vmatmul.mubr.f32.gmra.mxu0 %v535
        %v608 = vpop.f32.mrf.mxu0
        %v609 = vadd.f32 0.0, %v608
        %v610 = vpop.f32.mrf.mxu0
        %611 = vdwg.mxu0
        %v612 = vadd.f32 %v515, %v604
        %v613 = vadd.f32 %v520, %v609
        %614 = vst [vmem:[%s305] sm:$0xff] %v612
        %615 = vst [vmem:[%s305 + $0x8] sm:$0xff] %v613
        %v616 = vadd.f32 %v612, %v613
        %v617 = vrot.slane %v616, 4
        %v618 = vadd.f32 %v616, %v617
        %v619 = vrot.slane %v618, 2
        %v620 = vadd.f32 %v618, %v619
        %v621 = vrot.slane %v620, 1
        %v622 = vadd.f32 %v620, %v621
        %v623 = vmul.f32 %v612, %v612
        %v624 = vmul.f32 %v613, %v613
        %v625 = vadd.f32 %v623, %v624
        %v626 = vrot.slane %v625, 4
        %v627 = vadd.f32 %v625, %v626
        %v628 = vrot.slane %v627, 2
        %v629 = vadd.f32 %v627, %v628
        %v630 = vrot.slane %v629, 1
        %v631 = vadd.f32 %v629, %v630
        %v632 = vsel %vm334, %v622, %v631
        %633 = vst [vmem:[%s319] sm:$0x3] %v632
        %v634 = vld [vmem:[#allocation7] sm:$0xff]
        %v635 = vld [vmem:[#allocation7 + $0x8] sm:$0xff]
        %v636 = vld [vmem:[#allocation7 + $0x10] sm:$0xff]
        %v637 = vld [vmem:[#allocation7 + $0x18] sm:$0xff]
        %v638 = vld [vmem:[#allocation7 + $0x20] sm:$0xff]
        %v639 = vld [vmem:[#allocation7 + $0x28] sm:$0xff]
        %v640 = vld [vmem:[#allocation7 + $0x30] sm:$0xff]
        %v641 = vld [vmem:[#allocation7 + $0x38] sm:$0xff]
        %642 = vmatprep.subr.mxu0 0.0
        %643 = vmatpush1.msra.mxu0 0.0
        %644 = vmatprep.subr.mxu0 0.0
        %645 = vmatpush1.msra.mxu0 0.0
        %646 = vmatprep.subr.mxu0 0.0
        %647 = vmatpush1.msra.mxu0 0.0
        %648 = vmatprep.subr.mxu0 0.0
        %649 = vmatpush1.msra.mxu0 0.0
        %650 = vmatprep.subr.mxu0 0.0
        %651 = vmatpush1.msra.mxu0 0.0
        %652 = vmatprep.subr.mxu0 0.0
        %653 = vmatpush1.msra.mxu0 0.0
        %654 = vmatprep.subr.mxu0 0.0
        %655 = vmatpush1.msra.mxu0 0.0
        %656 = vmatprep.subr.mxu0 0.0
        %657 = vmatpush1.msra.mxu0 0.0
        %658 = vmatprep.subr.mxu0 0.0
        %659 = vmatpush1.msra.mxu0 %v641
        %660 = vmatprep.subr.mxu0 0.0
        %661 = vmatpush1.msra.mxu0 %v640
        %662 = vmatprep.subr.mxu0 0.0
        %663 = vmatpush1.msra.mxu0 %v639
        %664 = vmatprep.subr.mxu0 0.0
        %665 = vmatpush1.msra.mxu0 %v638
        %666 = vmatprep.subr.mxu0 0.0
        %667 = vmatpush1.msra.mxu0 %v637
        %668 = vmatprep.subr.mxu0 0.0
        %669 = vmatpush1.msra.mxu0 %v636
        %670 = vmatprep.subr.mxu0 0.0
        %671 = vmatpush1.msra.mxu0 %v635
        %672 = vmatprep.subr.mxu0 0.0
        %673 = vmatpush1.msra.mxu0 %v634
        %674 = vmatprep.subr.mxu0 0.0
        %675 = vmatpush2.msra.mxu0 0.0
        %676 = vmatprep.subr.mxu0 0.0
        %677 = vmatpush2.msra.mxu0 0.0
        %678 = vmatprep.subr.mxu0 0.0
        %679 = vmatpush2.msra.mxu0 0.0
        %680 = vmatprep.subr.mxu0 0.0
        %681 = vmatpush2.msra.mxu0 0.0
        %682 = vmatprep.subr.mxu0 0.0
        %683 = vmatpush2.msra.mxu0 0.0
        %684 = vmatprep.subr.mxu0 0.0
        %685 = vmatpush2.msra.mxu0 0.0
        %686 = vmatprep.subr.mxu0 0.0
        %687 = vmatpush2.msra.mxu0 0.0
        %688 = vmatprep.subr.mxu0 0.0
        %689 = vmatpush2.msra.mxu0 0.0
        %690 = vmatprep.subr.mxu0 0.0
        %691 = vmatpush2.msra.mxu0 0.0
        %692 = vmatprep.subr.mxu0 0.0
        %693 = vmatpush2.msra.mxu0 0.0
        %694 = vmatprep.subr.mxu0 0.0
        %695 = vmatpush2.msra.mxu0 0.0
        %696 = vmatprep.subr.mxu0 0.0
        %697 = vmatpush2.msra.mxu0 0.0
        %698 = vmatprep.subr.mxu0 0.0
        %699 = vmatpush2.msra.mxu0 0.0
        %700 = vmatprep.subr.mxu0 0.0
        %701 = vmatpush2.msra.mxu0 0.0
        %702 = vmatprep.subr.mxu0 0.0
        %703 = vmatpush2.msra.mxu0 0.0
        %704 = vmatprep.subr.mxu0 0.0
        %705 = vmatpush2.msra.mxu0 0.0
        %706 = vmatprep.mubr.f32.mxu0 0.0
        %707 = vmatmul.mubr.f32.gmra.mxu0 %v364
        %v708 = vpop.f32.mrf.mxu0
        %v709 = vadd.f32 0.0, %v708
        %v710 = vpop.f32.mrf.mxu0
        %711 = vmatprep.mubr.f32.mxu0 0.0
        %712 = vmatmul.mubr.f32.gmra.mxu0 %v366
        %v713 = vpop.f32.mrf.mxu0
        %v714 = vadd.f32 0.0, %v713
        %v715 = vpop.f32.mrf.mxu0
        %716 = vdwg.mxu0
        %717 = vst [vmem:[%s312] sm:$0xff] %v709
        %718 = vst [vmem:[%s312 + $0x8] sm:$0xff] %v714
        %v719 = vadd.f32 %v709, %v714
        %v720 = vrot.slane %v719, 4
        %v721 = vadd.f32 %v719, %v720
        %v722 = vrot.slane %v721, 2
        %v723 = vadd.f32 %v721, %v722
        %v724 = vrot.slane %v723, 1
        %v725 = vadd.f32 %v723, %v724
        %v726 = vmul.f32 %v709, %v709
        %v727 = vmul.f32 %v714, %v714
        %v728 = vadd.f32 %v726, %v727
        %v729 = vrot.slane %v728, 4
        %v730 = vadd.f32 %v728, %v729
        %v731 = vrot.slane %v730, 2
        %v732 = vadd.f32 %v730, %v731
        %v733 = vrot.slane %v732, 1
        %v734 = vadd.f32 %v732, %v733
        %v735 = vsel %vm334, %v725, %v734
        %736 = vst [vmem:[%s326] sm:$0x3] %v735
        %s737 = sand.u32 %s107, 1
        %s738 = scalar_lea.sflag [#allocation4], %s737
        %s739 = sand.u32 %s107, 1
        %s740 = smul.addr %s739, 16
        %s741 = scalar_lea.vmem [#allocation8], %s740
        %s742 = sand.u32 %s31, 1
        %s743 = scalar_lea.sflag [#allocation10], %s742
        %s744 = sand.u32 %s133, 1
        %s745 = smul.addr %s744, 16
        %s746 = scalar_lea.vmem [#allocation9], %s745
        %s747 = sand.u32 %s31, 1
        %s748 = scalar_lea.sflag [#allocation10], %s747
        %s749 = sand.u32 %s159, 1
        %s750 = smul.addr %s749, 2
        %s751 = scalar_lea.vmem [#allocation11], %s750
        %s752 = sand.u32 %s185, 1
        %s753 = scalar_lea.sflag [#allocation13], %s752
        %s754 = sand.u32 %s185, 1
        %s755 = smul.addr %s754, 2
        %s756 = scalar_lea.vmem [#allocation12], %s755
        // Predicated region
        $region45: #{tpu_custom_call.1} parent=31 // pred_check
          %p757 = pneg %p117
        $region46: #{tpu_custom_call.1} parent=31 // pred_check_branch
          %759 = sbr.rel (%p757) target = $region48
        $region47: #{tpu_custom_call.1} parent=31 // pred_region
          %s760 = smul.u32 2, %s31
          %s762 = ssub.s32 256, 256
          %763 = vsyncadd %s738, %s762
          %s764 = smul.addr %s760, 128
          %s765 = scalar_lea.hbm %s3, %s764
          %s766 = sshll.u32 %s741, 4
          %s767 = int_to_ptr.vmem [resolvable:$true] %s766
          %772 = dma.vmem_to_hbm [thread:$0]  %s767, 256, %s765, %s738, 128, 128, 8
        $region48: #{tpu_custom_call.1} parent=31 // pred_fallthru
          _
        // Predicated region
        $region49: #{tpu_custom_call.1} parent=31 // pred_check
          %p773 = pneg %p143
        $region50: #{tpu_custom_call.1} parent=31 // pred_check_branch
          %775 = sbr.rel (%p773) target = $region52
        $region51: #{tpu_custom_call.1} parent=31 // pred_region
          %s776 = smul.u32 2, %s31
          %s778 = ssub.s32 256, 256
          %779 = vsyncadd %s743, %s778
          %s780 = smul.addr %s776, 128
          %s781 = scalar_lea.hbm %s4, %s780
          %s782 = sshll.u32 %s746, 4
          %s783 = int_to_ptr.vmem [resolvable:$true] %s782
          %788 = dma.vmem_to_hbm [thread:$0]  %s783, 256, %s781, %s743, 128, 128, 8
        $region52: #{tpu_custom_call.1} parent=31 // pred_fallthru
          _
        // Predicated region
        $region53: #{tpu_custom_call.1} parent=31 // pred_check
          %p789 = pneg %p169
        $region54: #{tpu_custom_call.1} parent=31 // pred_check_branch
          %791 = sbr.rel (%p789) target = $region56
        $region55: #{tpu_custom_call.1} parent=31 // pred_region
          %s793 = ssub.s32 32, 32
          %794 = vsyncadd %s748, %s793
          %s795 = smul.addr %s31, 32
          %s796 = scalar_lea.hbm %s5, %s795
          %s798 = sshll.u32 %s751, 4
          %s799 = int_to_ptr.vmem [resolvable:$true] %s798
          %801 = dma.vmem_to_hbm [thread:$0]  %s799, 32, %s796, %s748
        $region56: #{tpu_custom_call.1} parent=31 // pred_fallthru
          _
        // Predicated region
        $region57: #{tpu_custom_call.1} parent=31 // pred_check
          %p802 = pneg %p195
        $region58: #{tpu_custom_call.1} parent=31 // pred_check_branch
          %804 = sbr.rel (%p802) target = $region60
        $region59: #{tpu_custom_call.1} parent=31 // pred_region
          %s806 = ssub.s32 32, 32
          %807 = vsyncadd %s753, %s806
          %s808 = smul.addr %s31, 32
          %s809 = scalar_lea.hbm %s6, %s808
          %s811 = sshll.u32 %s756, 4
          %s812 = int_to_ptr.vmem [resolvable:$true] %s811
          %814 = dma.vmem_to_hbm [thread:$0]  %s812, 32, %s809, %s753
        $region60: #{tpu_custom_call.1} parent=31 // pred_fallthru
          _
      $region32: #{tpu_custom_call.1} parent=5 // pred_fallthru
        _
      %p815 = scmp.le.s32.totalorder 2, %s26
      // Predicated region
      $region61: #{tpu_custom_call.1} parent=5 // pred_check
        %p816 = pneg %p815
      $region62: #{tpu_custom_call.1} parent=5 // pred_check_branch
        %818 = sbr.rel (%p816) target = $region64
      $region63: #{tpu_custom_call.1} parent=5 // pred_region
        %s819 = ssub.s32 %s26, 2
        // Predicated region
        $region65: #{tpu_custom_call.1} parent=63 // pred_check
          %p820 = pneg %p123
        $region66: #{tpu_custom_call.1} parent=63 // pred_check_branch
          %822 = sbr.rel (%p820) target = $region68
        $region67: #{tpu_custom_call.1} parent=63 // pred_region
          %s823 = sand.u32 %s108, 1
          %s824 = scalar_lea.sflag [#allocation4], %s823
          %s825 = sand.u32 %s108, 1
          %s826 = smul.addr %s825, 16
          %s827 = scalar_lea.vmem [#allocation8], %s826
          %828 = dma.done %s824, 256
        $region68: #{tpu_custom_call.1} parent=63 // pred_fallthru
          _
        // Predicated region
        $region69: #{tpu_custom_call.1} parent=63 // pred_check
          %p829 = pneg %p149
        $region70: #{tpu_custom_call.1} parent=63 // pred_check_branch
          %831 = sbr.rel (%p829) target = $region72
        $region71: #{tpu_custom_call.1} parent=63 // pred_region
          %s832 = sand.u32 %s32, 1
          %s833 = scalar_lea.sflag [#allocation10], %s832
          %s834 = sand.u32 %s134, 1
          %s835 = smul.addr %s834, 16
          %s836 = scalar_lea.vmem [#allocation9], %s835
          %837 = dma.done %s833, 256
        $region72: #{tpu_custom_call.1} parent=63 // pred_fallthru
          _
        // Predicated region
        $region73: #{tpu_custom_call.1} parent=63 // pred_check
          %p838 = pneg %p175
        $region74: #{tpu_custom_call.1} parent=63 // pred_check_branch
          %840 = sbr.rel (%p838) target = $region76
        $region75: #{tpu_custom_call.1} parent=63 // pred_region
          %s841 = sand.u32 %s32, 1
          %s842 = scalar_lea.sflag [#allocation10], %s841
          %s843 = sand.u32 %s160, 1
          %s844 = smul.addr %s843, 2
          %s845 = scalar_lea.vmem [#allocation11], %s844
          %846 = dma.done %s842, 32
        $region76: #{tpu_custom_call.1} parent=63 // pred_fallthru
          _
        // Predicated region
        $region77: #{tpu_custom_call.1} parent=63 // pred_check
          %p847 = pneg %p201
        $region78: #{tpu_custom_call.1} parent=63 // pred_check_branch
          %849 = sbr.rel (%p847) target = $region80
        $region79: #{tpu_custom_call.1} parent=63 // pred_region
          %s850 = sand.u32 %s186, 1
          %s851 = scalar_lea.sflag [#allocation13], %s850
          %s852 = sand.u32 %s186, 1
          %s853 = smul.addr %s852, 2
          %s854 = scalar_lea.vmem [#allocation12], %s853
          %855 = dma.done %s851, 32
        $region80: #{tpu_custom_call.1} parent=63 // pred_fallthru
          _
      $region64: #{tpu_custom_call.1} parent=5 // pred_fallthru
        _
    $region6: #{tpu_custom_call.1} parent=1 // loop_footer
      %s30 = sadd.s32 1, %s26
    $region7: #{tpu_custom_call.1} parent=1 // loop_footer_branch
      %25 = sbr.rel target = $region3
    $region8: #{tpu_custom_call.1} parent=1 // loop_exit
      _
    %856 = vsyncpa [#allocation3], 1
    %s857 = scalar_lea.sflag [#allocation3], 1
    %858 = vsyncpa %s857, 1
    %859 = vsyncpa [#allocation6], 1
    %860 = vsyncpa [#allocation4], 1
    %s861 = scalar_lea.sflag [#allocation4], 1
    %862 = vsyncpa %s861, 1
    %863 = vsyncpa [#allocation10], 1
    %s864 = scalar_lea.sflag [#allocation10], 1
    %865 = vsyncpa %s864, 1
    %866 = vsyncpa [#allocation13], 1
    %s867 = scalar_lea.sflag [#allocation13], 1
    %868 = vsyncpa %s867, 1

</llo_original>
